<compile_context>
chip_gen: v5e
topology: v5e:2x2
jax: 0.10.0
libtpu: 0.0.40
codegen_flags: <defaults>
</compile_context>

<pallas_src>
import jax
import jax.numpy as jnp
from jax.experimental import pallas as pl
from jax.experimental.pallas import tpu as pltpu


def _fc_softmax_kernel(x_ref, w_ref, b_ref, o_ref):
    # In-kernel f32 -> bf16 cast (VPU, hides under MXU/DMA), MXU matmul with
    # f32 accumulation, bias add + numerically-stable softmax in f32.
    x_bf16 = x_ref[...].astype(jnp.bfloat16)
    logits = jnp.dot(
        x_bf16, w_ref[...], preferred_element_type=jnp.float32
    ) + b_ref[...]
    m = jnp.max(logits, axis=1, keepdims=True)
    e = jnp.exp(logits - m)
    denom = jnp.sum(e, axis=1, keepdims=True)
    # Exact divide so rows sum to 1 (approx reciprocal was the correctness bug).
    o_ref[...] = (e / denom).astype(o_ref.dtype)


def prepare_params(weight, bias):
    """One-time parameter staging (hoisted out of the per-call hot path).

    weight: (N, K) float32  (PyTorch nn.Linear layout)
    bias:   (N,)   float32
    returns w_kn: (K, N) bfloat16, b2d: (1, N) float32
    """
    w_kn = jnp.asarray(weight).T.astype(jnp.bfloat16)      # (K, N)
    b2d = jnp.asarray(bias).reshape(1, -1).astype(jnp.float32)
    return w_kn, b2d


@jax.jit
def fc_softmax(x, w_kn, b2d):
    """Forward pass.

    x:    (B, C, H, W) float32  (NCHW, matches PyTorch input layout)
    w_kn: (K, N) bfloat16       (pre-transposed, from prepare_params)
    b2d:  (1, N) float32
    returns (B, N) float32 softmax probabilities over dim=1
    """
    B = x.shape[0]
    K, N = w_kn.shape
    x2d = x.reshape(B, -1)          # torch.flatten(x, 1); contiguous -> free

    return pl.pallas_call(
        _fc_softmax_kernel,
        out_shape=jax.ShapeDtypeStruct((B, N), jnp.float32),
        in_specs=[
            pl.BlockSpec(memory_space=pltpu.MemorySpace.VMEM),
            pl.BlockSpec(memory_space=pltpu.MemorySpace.VMEM),
            pl.BlockSpec(memory_space=pltpu.MemorySpace.VMEM),
        ],
        out_specs=pl.BlockSpec(memory_space=pltpu.MemorySpace.VMEM),
        cost_estimate=pl.CostEstimate(
            flops=2 * B * K * N,
            transcendentals=B * N,
            bytes_accessed=B * K * 4 + K * N * 2 + N * 4 + B * N * 4,
        ),
    )(x2d, w_kn, b2d)


if __name__ == "__main__":
    # cfg implied by the module: input_size = C*H*W, output_size = #classes
    B, C, H, W = 2, 4, 16, 16
    input_size = C * H * W          # 1024
    output_size = 128               # lane-dense output width

    key = jax.random.PRNGKey(0)
    kx, kw, kb = jax.random.split(key, 3)

    x = jax.random.normal(kx, (B, C, H, W), dtype=jnp.float32)
    # Deterministic synthetic parameters (PyTorch-like uniform init bound)
    bound = 1.0 / (input_size ** 0.5)
    weight = jax.random.uniform(
        kw, (output_size, input_size), minval=-bound, maxval=bound,
        dtype=jnp.float32)
    bias = jax.random.uniform(
        kb, (output_size,), minval=-bound, maxval=bound, dtype=jnp.float32)

    # One-time parameter staging (transpose + bf16 cast hoisted out of the call).
    w_kn, b2d = prepare_params(weight, bias)

    out = fc_softmax(x, w_kn, b2d)
    out = jax.block_until_ready(out)

    # Reference: same bf16 matmul inputs, f32 accumulation + exact softmax.
    x2d_ref = x.reshape(B, -1).astype(jnp.bfloat16)
    logits_ref = jnp.dot(x2d_ref, w_kn, preferred_element_type=jnp.float32) + bias
    ref = jax.nn.softmax(logits_ref, axis=1)

    assert out.shape == (B, output_size)
    # bf16 matmul inputs -> loosened elementwise tolerance vs. bf16 reference.
    assert jnp.allclose(out, ref, atol=2e-3, rtol=2e-2)
    # Exact divide: rows sum to 1 up to f32 rounding.
    assert jnp.allclose(jnp.sum(out, axis=1), 1.0, atol=2e-3)

    print("KERNEL_OK")
</pallas_src>

<mosaic_0001>
module attributes {stable_mosaic.version = 11 : i64} {
  func.func @_fc_softmax_kernel(%arg0: memref<2x1024xf32, #tpu.memory_space<vmem>>, %arg1: memref<1024x128xbf16, #tpu.memory_space<vmem>>, %arg2: memref<1x128xf32, #tpu.memory_space<vmem>>, %arg3: memref<2x128xf32, #tpu.memory_space<vmem>>) attributes {dimension_semantics = [], scalar_prefetch = 0 : i64, scratch_operands = 0 : i64, tpu.core_type = #tpu.core_type<tc>} {
    %c0 = arith.constant 0 : index
    %c0_0 = arith.constant 0 : index
    %0 = vector.load %arg0[%c0, %c0_0] : memref<2x1024xf32, #tpu.memory_space<vmem>>, vector<2x1024xf32>
    %1 = arith.truncf %0 : vector<2x1024xf32> to vector<2x1024xbf16>
    %c0_1 = arith.constant 0 : index
    %c0_2 = arith.constant 0 : index
    %2 = vector.load %arg1[%c0_1, %c0_2] : memref<1024x128xbf16, #tpu.memory_space<vmem>>, vector<1024x128xbf16>
    %cst = arith.constant dense<0.000000e+00> : vector<2x128xf32>
    %3 = tpu.matmul %1, %2, %cst {dimension_numbers = #tpu.dot_dimension_numbers<[1], [0], [0], [1], [0, 0, 1, 1], [], []>} : vector<2x1024xbf16>, vector<1024x128xbf16>, vector<2x128xf32> -> vector<2x128xf32>
    %c0_3 = arith.constant 0 : index
    %c0_4 = arith.constant 0 : index
    %4 = vector.load %arg2[%c0_3, %c0_4] : memref<1x128xf32, #tpu.memory_space<vmem>>, vector<1x128xf32>
    %5 = vector.broadcast %4 : vector<1x128xf32> to vector<2x128xf32>
    %6 = arith.addf %3, %5 : vector<2x128xf32>
    %cst_5 = arith.constant dense<0xFF800000> : vector<2xf32>
    %7 = vector.multi_reduction <maximumf>, %6, %cst_5 [1] : vector<2x128xf32> to vector<2xf32>
    %8 = vector.shape_cast %7 : vector<2xf32> to vector<2x1xf32>
    %9 = vector.broadcast %8 : vector<2x1xf32> to vector<2x128xf32>
    %10 = arith.subf %6, %9 : vector<2x128xf32>
    %11 = math.exp %10 : vector<2x128xf32>
    %cst_6 = arith.constant dense<0.000000e+00> : vector<2xf32>
    %12 = vector.multi_reduction <add>, %11, %cst_6 [1] : vector<2x128xf32> to vector<2xf32>
    %13 = vector.shape_cast %12 : vector<2xf32> to vector<2x1xf32>
    %14 = vector.broadcast %13 : vector<2x1xf32> to vector<2x128xf32>
    %15 = arith.divf %11, %14 : vector<2x128xf32>
    %c0_7 = arith.constant 0 : index
    %c0_8 = arith.constant 0 : index
    %16 = vector.load %arg3[%c0_7, %c0_8] : memref<2x128xf32, #tpu.memory_space<vmem>>, vector<2x128xf32>
    tpu.vector_store %arg3[%c0_7, %c0_8], %15 {strides = array<i32>} : memref<2x128xf32, #tpu.memory_space<vmem>>, vector<2x128xf32>,
    return
  }
}

</mosaic_0001>

<llo_original>
// kernel: fc_softmax.1
$region0: #{fc_softmax.1}
  #allocation0 [shape = 'u32[]', space=smem, size = 0x4, offset = 0x4, fixed_abs, tag = 'smem constant byte address 0x4 - core index']
  #allocation1 [shape = 'u32[72,128]{1,0:T(1,128)}', space=vmem, size = 0x9000, scoped, tag = 'internal scratch']
  %s0 = inlined_call_operand.vmem [shape: f32[2,1024], index: 0, kind: input, shape index: {}]
  %s1 = inlined_call_operand.hbm [shape: bf16[1024,128], index: 1, kind: input, shape index: {}]
  %s2 = inlined_call_operand.vmem [shape: f32[1,128], index: 2, kind: input, shape index: {}]
  %s3 = inlined_call_operand.hbm [shape: f32[2,128], index: 3, kind: output, shape index: {}]
  %s4 = sld [smem:[#allocation0]]
  $region26: #{fc_softmax.1} parent=0
    _
  %s6 = ssub.s32 1, %s4
  %s7 = scalar_select 0, %s6, %s4
  $region1: #{fc_softmax.1} parent=0
    #allocation2 [shape = 'u8[262144]{0}', space=vmem, size = 0x40000, scoped, tag = 'input window, operand 1, single buffered']
    #allocation3 [shape = 's32[1]{0}', space=sflag, size = 0x4, scoped, tag = 'scoped memory for fc_softmax.1']
    #allocation4 [shape = 's32[1]{0}', space=sflag, size = 0x4, scoped, tag = 'scoped memory for fc_softmax.1']
    #allocation5 [shape = 'u8[1024]{0}', space=vmem, size = 0x400, scoped, tag = 'output window, operand 0, single buffered']
    %8 = vsyncpa [#allocation3], 0
    %9 = vsyncpa [#allocation4], 0
    // Predicated region
    $region2: #{fc_softmax.1} parent=1 // pred_check
      _
    $region3: #{fc_softmax.1} parent=1 // pred_check_branch
      %11 = sbr.rel (0) target = $region5
    $region4: #{fc_softmax.1} parent=1 // pred_region
      _
    $region5: #{fc_softmax.1} parent=1 // pred_fallthru
      _
    // Predicated region
    $region6: #{fc_softmax.1} parent=1 // pred_check
      _
    $region7: #{fc_softmax.1} parent=1 // pred_check_branch
      %13 = sbr.rel (0) target = $region9
    $region8: #{fc_softmax.1} parent=1 // pred_region
      %15 = vsyncadd [#allocation3], 0
      %s16 = sshll.u32 %s1, 4
      %s17 = int_to_ptr.hbm [resolvable:$true] %s16
      %s18 = sshll.u32 [#allocation2], 4
      %s19 = int_to_ptr.vmem [resolvable:$true] %s18
      %24 = dma.hbm_to_vmem [thread:$0]  %s17, 8192, %s19, [#allocation3], 64, 64, 4
    $region9: #{fc_softmax.1} parent=1 // pred_fallthru
      _
    // Predicated region
    $region10: #{fc_softmax.1} parent=1 // pred_check
      _
    $region11: #{fc_softmax.1} parent=1 // pred_check_branch
      %26 = sbr.rel (0) target = $region13
    $region12: #{fc_softmax.1} parent=1 // pred_region
      _
    $region13: #{fc_softmax.1} parent=1 // pred_fallthru
      _
    // Predicated region
    $region14: #{fc_softmax.1} parent=1 // pred_check
      _
    $region15: #{fc_softmax.1} parent=1 // pred_check_branch
      %28 = sbr.rel (0) target = $region17
    $region16: #{fc_softmax.1} parent=1 // pred_region
      %30 = dma.done [#allocation3], 8192
    $region17: #{fc_softmax.1} parent=1 // pred_fallthru
      _
    %v31 = vld [vmem:[%s0] sm:$0xff]
    %v32 = vld [vmem:[%s0 + $0x8] sm:$0xff]
    %35 = vst [vmem:[#allocation1] ss:$4 sm:$0xff] %v31
    %s36 = scalar_lea.vmem [#allocation1], 32
    %37 = vst [vmem:[%s36] ss:$4 sm:$0xff] %v32
    %v38 = vld.sshfl [vmem:[#allocation1] sm:$0xff pattern:$0x73625140]
    %v39 = vld.sshfl [vmem:[#allocation1 + $0x8] sm:$0xff pattern:$0x73625140]
    %v40 = vld.sshfl [vmem:[#allocation1 + $0x10] sm:$0xff pattern:$0x73625140]
    %v41 = vld.sshfl [vmem:[#allocation1 + $0x18] sm:$0xff pattern:$0x73625140]
    %v42 = vld.sshfl [vmem:[#allocation1 + $0x20] sm:$0xff pattern:$0x73625140]
    %v43 = vld.sshfl [vmem:[#allocation1 + $0x28] sm:$0xff pattern:$0x73625140]
    %v44 = vld.sshfl [vmem:[#allocation1 + $0x30] sm:$0xff pattern:$0x73625140]
    %v45 = vld.sshfl [vmem:[#allocation1 + $0x38] sm:$0xff pattern:$0x73625140]
    %v54 = vpack.c.bf16 %v38, %v38
    %v55 = vpack.c.bf16 %v39, %v39
    %v56 = vpack.c.bf16 %v40, %v40
    %v57 = vpack.c.bf16 %v41, %v41
    %v58 = vpack.c.bf16 %v42, %v42
    %v59 = vpack.c.bf16 %v43, %v43
    %v60 = vpack.c.bf16 %v44, %v44
    %v61 = vpack.c.bf16 %v45, %v45
    %v62 = vld [vmem:[#allocation2] sm:$0xf]
    %v63 = vld [vmem:[#allocation2 + $0x4] sm:$0xf]
    %v64 = vld [vmem:[#allocation2 + $0x8] sm:$0xf]
    %v65 = vld [vmem:[#allocation2 + $0xc] sm:$0xf]
    %v66 = vld [vmem:[#allocation2 + $0x10] sm:$0xf]
    %v67 = vld [vmem:[#allocation2 + $0x14] sm:$0xf]
    %v68 = vld [vmem:[#allocation2 + $0x18] sm:$0xf]
    %v69 = vld [vmem:[#allocation2 + $0x1c] sm:$0xf]
    %v70 = vld [vmem:[#allocation2 + $0x20] sm:$0xf]
    %v71 = vld [vmem:[#allocation2 + $0x24] sm:$0xf]
    %v72 = vld [vmem:[#allocation2 + $0x28] sm:$0xf]
    %v73 = vld [vmem:[#allocation2 + $0x2c] sm:$0xf]
    %v74 = vld [vmem:[#allocation2 + $0x30] sm:$0xf]
    %v75 = vld [vmem:[#allocation2 + $0x34] sm:$0xf]
    %v76 = vld [vmem:[#allocation2 + $0x38] sm:$0xf]
    %v77 = vld [vmem:[#allocation2 + $0x3c] sm:$0xf]
    %v78 = vld [vmem:[#allocation2 + $0x40] sm:$0xf]
    %v79 = vld [vmem:[#allocation2 + $0x44] sm:$0xf]
    %v80 = vld [vmem:[#allocation2 + $0x48] sm:$0xf]
    %v81 = vld [vmem:[#allocation2 + $0x4c] sm:$0xf]
    %v82 = vld [vmem:[#allocation2 + $0x50] sm:$0xf]
    %v83 = vld [vmem:[#allocation2 + $0x54] sm:$0xf]
    %v84 = vld [vmem:[#allocation2 + $0x58] sm:$0xf]
    %v85 = vld [vmem:[#allocation2 + $0x5c] sm:$0xf]
    %v86 = vld [vmem:[#allocation2 + $0x60] sm:$0xf]
    %v87 = vld [vmem:[#allocation2 + $0x64] sm:$0xf]
    %v88 = vld [vmem:[#allocation2 + $0x68] sm:$0xf]
    %v89 = vld [vmem:[#allocation2 + $0x6c] sm:$0xf]
    %v90 = vld [vmem:[#allocation2 + $0x70] sm:$0xf]
    %v91 = vld [vmem:[#allocation2 + $0x74] sm:$0xf]
    %v92 = vld [vmem:[#allocation2 + $0x78] sm:$0xf]
    %v93 = vld [vmem:[#allocation2 + $0x7c] sm:$0xf]
    %v94 = vld [vmem:[#allocation2 + $0x80] sm:$0xf]
    %v95 = vld [vmem:[#allocation2 + $0x84] sm:$0xf]
    %v96 = vld [vmem:[#allocation2 + $0x88] sm:$0xf]
    %v97 = vld [vmem:[#allocation2 + $0x8c] sm:$0xf]
    %v98 = vld [vmem:[#allocation2 + $0x90] sm:$0xf]
    %v99 = vld [vmem:[#allocation2 + $0x94] sm:$0xf]
    %v100 = vld [vmem:[#allocation2 + $0x98] sm:$0xf]
    %v101 = vld [vmem:[#allocation2 + $0x9c] sm:$0xf]
    %v102 = vld [vmem:[#allocation2 + $0xa0] sm:$0xf]
    %v103 = vld [vmem:[#allocation2 + $0xa4] sm:$0xf]
    %v104 = vld [vmem:[#allocation2 + $0xa8] sm:$0xf]
    %v105 = vld [vmem:[#allocation2 + $0xac] sm:$0xf]
    %v106 = vld [vmem:[#allocation2 + $0xb0] sm:$0xf]
    %v107 = vld [vmem:[#allocation2 + $0xb4] sm:$0xf]
    %v108 = vld [vmem:[#allocation2 + $0xb8] sm:$0xf]
    %v109 = vld [vmem:[#allocation2 + $0xbc] sm:$0xf]
    %v110 = vld [vmem:[#allocation2 + $0xc0] sm:$0xf]
    %v111 = vld [vmem:[#allocation2 + $0xc4] sm:$0xf]
    %v112 = vld [vmem:[#allocation2 + $0xc8] sm:$0xf]
    %v113 = vld [vmem:[#allocation2 + $0xcc] sm:$0xf]
    %v114 = vld [vmem:[#allocation2 + $0xd0] sm:$0xf]
    %v115 = vld [vmem:[#allocation2 + $0xd4] sm:$0xf]
    %v116 = vld [vmem:[#allocation2 + $0xd8] sm:$0xf]
    %v117 = vld [vmem:[#allocation2 + $0xdc] sm:$0xf]
    %v118 = vld [vmem:[#allocation2 + $0xe0] sm:$0xf]
    %v119 = vld [vmem:[#allocation2 + $0xe4] sm:$0xf]
    %v120 = vld [vmem:[#allocation2 + $0xe8] sm:$0xf]
    %v121 = vld [vmem:[#allocation2 + $0xec] sm:$0xf]
    %v122 = vld [vmem:[#allocation2 + $0xf0] sm:$0xf]
    %v123 = vld [vmem:[#allocation2 + $0xf4] sm:$0xf]
    %v124 = vld [vmem:[#allocation2 + $0xf8] sm:$0xf]
    %v125 = vld [vmem:[#allocation2 + $0xfc] sm:$0xf]
    %v126 = vld [vmem:[#allocation2 + $0x100] sm:$0xf]
    %v127 = vld [vmem:[#allocation2 + $0x104] sm:$0xf]
    %v128 = vld [vmem:[#allocation2 + $0x108] sm:$0xf]
    %v129 = vld [vmem:[#allocation2 + $0x10c] sm:$0xf]
    %v130 = vld [vmem:[#allocation2 + $0x110] sm:$0xf]
    %v131 = vld [vmem:[#allocation2 + $0x114] sm:$0xf]
    %v132 = vld [vmem:[#allocation2 + $0x118] sm:$0xf]
    %v133 = vld [vmem:[#allocation2 + $0x11c] sm:$0xf]
    %v134 = vld [vmem:[#allocation2 + $0x120] sm:$0xf]
    %v135 = vld [vmem:[#allocation2 + $0x124] sm:$0xf]
    %v136 = vld [vmem:[#allocation2 + $0x128] sm:$0xf]
    %v137 = vld [vmem:[#allocation2 + $0x12c] sm:$0xf]
    %v138 = vld [vmem:[#allocation2 + $0x130] sm:$0xf]
    %v139 = vld [vmem:[#allocation2 + $0x134] sm:$0xf]
    %v140 = vld [vmem:[#allocation2 + $0x138] sm:$0xf]
    %v141 = vld [vmem:[#allocation2 + $0x13c] sm:$0xf]
    %v142 = vld [vmem:[#allocation2 + $0x140] sm:$0xf]
    %v143 = vld [vmem:[#allocation2 + $0x144] sm:$0xf]
    %v144 = vld [vmem:[#allocation2 + $0x148] sm:$0xf]
    %v145 = vld [vmem:[#allocation2 + $0x14c] sm:$0xf]
    %v146 = vld [vmem:[#allocation2 + $0x150] sm:$0xf]
    %v147 = vld [vmem:[#allocation2 + $0x154] sm:$0xf]
    %v148 = vld [vmem:[#allocation2 + $0x158] sm:$0xf]
    %v149 = vld [vmem:[#allocation2 + $0x15c] sm:$0xf]
    %v150 = vld [vmem:[#allocation2 + $0x160] sm:$0xf]
    %v151 = vld [vmem:[#allocation2 + $0x164] sm:$0xf]
    %v152 = vld [vmem:[#allocation2 + $0x168] sm:$0xf]
    %v153 = vld [vmem:[#allocation2 + $0x16c] sm:$0xf]
    %v154 = vld [vmem:[#allocation2 + $0x170] sm:$0xf]
    %v155 = vld [vmem:[#allocation2 + $0x174] sm:$0xf]
    %v156 = vld [vmem:[#allocation2 + $0x178] sm:$0xf]
    %v157 = vld [vmem:[#allocation2 + $0x17c] sm:$0xf]
    %v158 = vld [vmem:[#allocation2 + $0x180] sm:$0xf]
    %v159 = vld [vmem:[#allocation2 + $0x184] sm:$0xf]
    %v160 = vld [vmem:[#allocation2 + $0x188] sm:$0xf]
    %v161 = vld [vmem:[#allocation2 + $0x18c] sm:$0xf]
    %v162 = vld [vmem:[#allocation2 + $0x190] sm:$0xf]
    %v163 = vld [vmem:[#allocation2 + $0x194] sm:$0xf]
    %v164 = vld [vmem:[#allocation2 + $0x198] sm:$0xf]
    %v165 = vld [vmem:[#allocation2 + $0x19c] sm:$0xf]
    %v166 = vld [vmem:[#allocation2 + $0x1a0] sm:$0xf]
    %v167 = vld [vmem:[#allocation2 + $0x1a4] sm:$0xf]
    %v168 = vld [vmem:[#allocation2 + $0x1a8] sm:$0xf]
    %v169 = vld [vmem:[#allocation2 + $0x1ac] sm:$0xf]
    %v170 = vld [vmem:[#allocation2 + $0x1b0] sm:$0xf]
    %v171 = vld [vmem:[#allocation2 + $0x1b4] sm:$0xf]
    %v172 = vld [vmem:[#allocation2 + $0x1b8] sm:$0xf]
    %v173 = vld [vmem:[#allocation2 + $0x1bc] sm:$0xf]
    %v174 = vld [vmem:[#allocation2 + $0x1c0] sm:$0xf]
    %v175 = vld [vmem:[#allocation2 + $0x1c4] sm:$0xf]
    %v176 = vld [vmem:[#allocation2 + $0x1c8] sm:$0xf]
    %v177 = vld [vmem:[#allocation2 + $0x1cc] sm:$0xf]
    %v178 = vld [vmem:[#allocation2 + $0x1d0] sm:$0xf]
    %v179 = vld [vmem:[#allocation2 + $0x1d4] sm:$0xf]
    %v180 = vld [vmem:[#allocation2 + $0x1d8] sm:$0xf]
    %v181 = vld [vmem:[#allocation2 + $0x1dc] sm:$0xf]
    %v182 = vld [vmem:[#allocation2 + $0x1e0] sm:$0xf]
    %v183 = vld [vmem:[#allocation2 + $0x1e4] sm:$0xf]
    %v184 = vld [vmem:[#allocation2 + $0x1e8] sm:$0xf]
    %v185 = vld [vmem:[#allocation2 + $0x1ec] sm:$0xf]
    %v186 = vld [vmem:[#allocation2 + $0x1f0] sm:$0xf]
    %v187 = vld [vmem:[#allocation2 + $0x1f4] sm:$0xf]
    %v188 = vld [vmem:[#allocation2 + $0x1f8] sm:$0xf]
    %v189 = vld [vmem:[#allocation2 + $0x1fc] sm:$0xf]
    %v190 = vld [vmem:[%s2] sm:$0x1]
    %v192 = vperm.slane %v190, 0
    %v322 = vunpack.c.l.b16 %v62
    %v323 = vunpack.c.l.b16 %v63
    %v324 = vunpack.c.l.b16 %v64
    %v325 = vunpack.c.l.b16 %v65
    %v326 = vunpack.c.l.b16 %v66
    %v327 = vunpack.c.l.b16 %v67
    %v328 = vunpack.c.l.b16 %v68
    %v329 = vunpack.c.l.b16 %v69
    %v330 = vunpack.c.l.b16 %v70
    %v331 = vunpack.c.l.b16 %v71
    %v332 = vunpack.c.l.b16 %v72
    %v333 = vunpack.c.l.b16 %v73
    %v334 = vunpack.c.l.b16 %v74
    %v335 = vunpack.c.l.b16 %v75
    %v336 = vunpack.c.l.b16 %v76
    %v337 = vunpack.c.l.b16 %v77
    %v338 = vunpack.c.l.b16 %v78
    %v339 = vunpack.c.l.b16 %v79
    %v340 = vunpack.c.l.b16 %v80
    %v341 = vunpack.c.l.b16 %v81
    %v342 = vunpack.c.l.b16 %v82
    %v343 = vunpack.c.l.b16 %v83
    %v344 = vunpack.c.l.b16 %v84
    %v345 = vunpack.c.l.b16 %v85
    %v346 = vunpack.c.l.b16 %v86
    %v347 = vunpack.c.l.b16 %v87
    %v348 = vunpack.c.l.b16 %v88
    %v349 = vunpack.c.l.b16 %v89
    %v350 = vunpack.c.l.b16 %v90
    %v351 = vunpack.c.l.b16 %v91
    %v352 = vunpack.c.l.b16 %v92
    %v353 = vunpack.c.l.b16 %v93
    %v354 = vunpack.c.l.b16 %v94
    %v355 = vunpack.c.l.b16 %v95
    %v356 = vunpack.c.l.b16 %v96
    %v357 = vunpack.c.l.b16 %v97
    %v358 = vunpack.c.l.b16 %v98
    %v359 = vunpack.c.l.b16 %v99
    %v360 = vunpack.c.l.b16 %v100
    %v361 = vunpack.c.l.b16 %v101
    %v362 = vunpack.c.l.b16 %v102
    %v363 = vunpack.c.l.b16 %v103
    %v364 = vunpack.c.l.b16 %v104
    %v365 = vunpack.c.l.b16 %v105
    %v366 = vunpack.c.l.b16 %v106
    %v367 = vunpack.c.l.b16 %v107
    %v368 = vunpack.c.l.b16 %v108
    %v369 = vunpack.c.l.b16 %v109
    %v370 = vunpack.c.l.b16 %v110
    %v371 = vunpack.c.l.b16 %v111
    %v372 = vunpack.c.l.b16 %v112
    %v373 = vunpack.c.l.b16 %v113
    %v374 = vunpack.c.l.b16 %v114
    %v375 = vunpack.c.l.b16 %v115
    %v376 = vunpack.c.l.b16 %v116
    %v377 = vunpack.c.l.b16 %v117
    %v378 = vunpack.c.l.b16 %v118
    %v379 = vunpack.c.l.b16 %v119
    %v380 = vunpack.c.l.b16 %v120
    %v381 = vunpack.c.l.b16 %v121
    %v382 = vunpack.c.l.b16 %v122
    %v383 = vunpack.c.l.b16 %v123
    %v384 = vunpack.c.l.b16 %v124
    %v385 = vunpack.c.l.b16 %v125
    %v386 = vunpack.c.l.b16 %v126
    %v387 = vunpack.c.l.b16 %v127
    %v388 = vunpack.c.l.b16 %v128
    %v389 = vunpack.c.l.b16 %v129
    %v390 = vunpack.c.l.b16 %v130
    %v391 = vunpack.c.l.b16 %v131
    %v392 = vunpack.c.l.b16 %v132
    %v393 = vunpack.c.l.b16 %v133
    %v394 = vunpack.c.l.b16 %v134
    %v395 = vunpack.c.l.b16 %v135
    %v396 = vunpack.c.l.b16 %v136
    %v397 = vunpack.c.l.b16 %v137
    %v398 = vunpack.c.l.b16 %v138
    %v399 = vunpack.c.l.b16 %v139
    %v400 = vunpack.c.l.b16 %v140
    %v401 = vunpack.c.l.b16 %v141
    %v402 = vunpack.c.l.b16 %v142
    %v403 = vunpack.c.l.b16 %v143
    %v404 = vunpack.c.l.b16 %v144
    %v405 = vunpack.c.l.b16 %v145
    %v406 = vunpack.c.l.b16 %v146
    %v407 = vunpack.c.l.b16 %v147
    %v408 = vunpack.c.l.b16 %v148
    %v409 = vunpack.c.l.b16 %v149
    %v410 = vunpack.c.l.b16 %v150
    %v411 = vunpack.c.l.b16 %v151
    %v412 = vunpack.c.l.b16 %v152
    %v413 = vunpack.c.l.b16 %v153
    %v414 = vunpack.c.l.b16 %v154
    %v415 = vunpack.c.l.b16 %v155
    %v416 = vunpack.c.l.b16 %v156
    %v417 = vunpack.c.l.b16 %v157
    %v418 = vunpack.c.l.b16 %v158
    %v419 = vunpack.c.l.b16 %v159
    %v420 = vunpack.c.l.b16 %v160
    %v421 = vunpack.c.l.b16 %v161
    %v422 = vunpack.c.l.b16 %v162
    %v423 = vunpack.c.l.b16 %v163
    %v424 = vunpack.c.l.b16 %v164
    %v425 = vunpack.c.l.b16 %v165
    %v426 = vunpack.c.l.b16 %v166
    %v427 = vunpack.c.l.b16 %v167
    %v428 = vunpack.c.l.b16 %v168
    %v429 = vunpack.c.l.b16 %v169
    %v430 = vunpack.c.l.b16 %v170
    %v431 = vunpack.c.l.b16 %v171
    %v432 = vunpack.c.l.b16 %v172
    %v433 = vunpack.c.l.b16 %v173
    %v434 = vunpack.c.l.b16 %v174
    %v435 = vunpack.c.l.b16 %v175
    %v436 = vunpack.c.l.b16 %v176
    %v437 = vunpack.c.l.b16 %v177
    %v438 = vunpack.c.l.b16 %v178
    %v439 = vunpack.c.l.b16 %v179
    %v440 = vunpack.c.l.b16 %v180
    %v441 = vunpack.c.l.b16 %v181
    %v442 = vunpack.c.l.b16 %v182
    %v443 = vunpack.c.l.b16 %v183
    %v444 = vunpack.c.l.b16 %v184
    %v445 = vunpack.c.l.b16 %v185
    %v446 = vunpack.c.l.b16 %v186
    %v447 = vunpack.c.l.b16 %v187
    %v448 = vunpack.c.l.b16 %v188
    %v449 = vunpack.c.l.b16 %v189
    %v450 = vpack.c.b16 %v323, %v322
    %v451 = vpack.c.b16 %v325, %v324
    %v452 = vpack.c.b16 %v327, %v326
    %v453 = vpack.c.b16 %v329, %v328
    %v454 = vpack.c.b16 %v331, %v330
    %v455 = vpack.c.b16 %v333, %v332
    %v456 = vpack.c.b16 %v335, %v334
    %v457 = vpack.c.b16 %v337, %v336
    %v458 = vpack.c.b16 %v339, %v338
    %v459 = vpack.c.b16 %v341, %v340
    %v460 = vpack.c.b16 %v343, %v342
    %v461 = vpack.c.b16 %v345, %v344
    %v462 = vpack.c.b16 %v347, %v346
    %v463 = vpack.c.b16 %v349, %v348
    %v464 = vpack.c.b16 %v351, %v350
    %v465 = vpack.c.b16 %v353, %v352
    %v466 = vpack.c.b16 %v355, %v354
    %v467 = vpack.c.b16 %v357, %v356
    %v468 = vpack.c.b16 %v359, %v358
    %v469 = vpack.c.b16 %v361, %v360
    %v470 = vpack.c.b16 %v363, %v362
    %v471 = vpack.c.b16 %v365, %v364
    %v472 = vpack.c.b16 %v367, %v366
    %v473 = vpack.c.b16 %v369, %v368
    %v474 = vpack.c.b16 %v371, %v370
    %v475 = vpack.c.b16 %v373, %v372
    %v476 = vpack.c.b16 %v375, %v374
    %v477 = vpack.c.b16 %v377, %v376
    %v478 = vpack.c.b16 %v379, %v378
    %v479 = vpack.c.b16 %v381, %v380
    %v480 = vpack.c.b16 %v383, %v382
    %v481 = vpack.c.b16 %v385, %v384
    %v482 = vpack.c.b16 %v387, %v386
    %v483 = vpack.c.b16 %v389, %v388
    %v484 = vpack.c.b16 %v391, %v390
    %v485 = vpack.c.b16 %v393, %v392
    %v486 = vpack.c.b16 %v395, %v394
    %v487 = vpack.c.b16 %v397, %v396
    %v488 = vpack.c.b16 %v399, %v398
    %v489 = vpack.c.b16 %v401, %v400
    %v490 = vpack.c.b16 %v403, %v402
    %v491 = vpack.c.b16 %v405, %v404
    %v492 = vpack.c.b16 %v407, %v406
    %v493 = vpack.c.b16 %v409, %v408
    %v494 = vpack.c.b16 %v411, %v410
    %v495 = vpack.c.b16 %v413, %v412
    %v496 = vpack.c.b16 %v415, %v414
    %v497 = vpack.c.b16 %v417, %v416
    %v498 = vpack.c.b16 %v419, %v418
    %v499 = vpack.c.b16 %v421, %v420
    %v500 = vpack.c.b16 %v423, %v422
    %v501 = vpack.c.b16 %v425, %v424
    %v502 = vpack.c.b16 %v427, %v426
    %v503 = vpack.c.b16 %v429, %v428
    %v504 = vpack.c.b16 %v431, %v430
    %v505 = vpack.c.b16 %v433, %v432
    %v506 = vpack.c.b16 %v435, %v434
    %v507 = vpack.c.b16 %v437, %v436
    %v508 = vpack.c.b16 %v439, %v438
    %v509 = vpack.c.b16 %v441, %v440
    %v510 = vpack.c.b16 %v443, %v442
    %v511 = vpack.c.b16 %v445, %v444
    %v512 = vpack.c.b16 %v447, %v446
    %v513 = vpack.c.b16 %v449, %v448
    %578 = vmatpush.bf16.msra.mxu0 %v457
    %579 = vmatpush.bf16.msra.mxu0 %v456
    %580 = vmatpush.bf16.msra.mxu0 %v455
    %581 = vmatpush.bf16.msra.mxu0 %v454
    %582 = vmatpush.bf16.msra.mxu0 %v453
    %583 = vmatpush.bf16.msra.mxu0 %v452
    %584 = vmatpush.bf16.msra.mxu0 %v451
    %585 = vmatpush.bf16.msra.mxu0 %v450
    %586 = vmatmul.bf16.gmra.mxu0 %v54
    %v587 = vpop.f32.mrf.mxu0
    %v588 = vadd.f32 %v192, %v587
    %v589 = vpop.f32.mrf.mxu0
    %590 = vdwg.mxu0
    %591 = vmatpush.bf16.msra.mxu0 %v465
    %592 = vmatpush.bf16.msra.mxu0 %v464
    %593 = vmatpush.bf16.msra.mxu0 %v463
    %594 = vmatpush.bf16.msra.mxu0 %v462
    %595 = vmatpush.bf16.msra.mxu0 %v461
    %596 = vmatpush.bf16.msra.mxu0 %v460
    %597 = vmatpush.bf16.msra.mxu0 %v459
    %598 = vmatpush.bf16.msra.mxu0 %v458
    %599 = vmatmul.bf16.gmra.mxu0 %v55
    %v600 = vpop.f32.mrf.mxu0
    %v601 = vadd.f32 %v588, %v600
    %v602 = vpop.f32.mrf.mxu0
    %603 = vdwg.mxu0
    %604 = vmatpush.bf16.msra.mxu0 %v473
    %605 = vmatpush.bf16.msra.mxu0 %v472
    %606 = vmatpush.bf16.msra.mxu0 %v471
    %607 = vmatpush.bf16.msra.mxu0 %v470
    %608 = vmatpush.bf16.msra.mxu0 %v469
    %609 = vmatpush.bf16.msra.mxu0 %v468
    %610 = vmatpush.bf16.msra.mxu0 %v467
    %611 = vmatpush.bf16.msra.mxu0 %v466
    %612 = vmatmul.bf16.gmra.mxu0 %v56
    %v613 = vpop.f32.mrf.mxu0
    %v614 = vadd.f32 %v601, %v613
    %v615 = vpop.f32.mrf.mxu0
    %616 = vdwg.mxu0
    %617 = vmatpush.bf16.msra.mxu0 %v481
    %618 = vmatpush.bf16.msra.mxu0 %v480
    %619 = vmatpush.bf16.msra.mxu0 %v479
    %620 = vmatpush.bf16.msra.mxu0 %v478
    %621 = vmatpush.bf16.msra.mxu0 %v477
    %622 = vmatpush.bf16.msra.mxu0 %v476
    %623 = vmatpush.bf16.msra.mxu0 %v475
    %624 = vmatpush.bf16.msra.mxu0 %v474
    %625 = vmatmul.bf16.gmra.mxu0 %v57
    %v626 = vpop.f32.mrf.mxu0
    %v627 = vadd.f32 %v614, %v626
    %v628 = vpop.f32.mrf.mxu0
    %629 = vdwg.mxu0
    %630 = vmatpush.bf16.msra.mxu0 %v489
    %631 = vmatpush.bf16.msra.mxu0 %v488
    %632 = vmatpush.bf16.msra.mxu0 %v487
    %633 = vmatpush.bf16.msra.mxu0 %v486
    %634 = vmatpush.bf16.msra.mxu0 %v485
    %635 = vmatpush.bf16.msra.mxu0 %v484
    %636 = vmatpush.bf16.msra.mxu0 %v483
    %637 = vmatpush.bf16.msra.mxu0 %v482
    %638 = vmatmul.bf16.gmra.mxu0 %v58
    %v639 = vpop.f32.mrf.mxu0
    %v640 = vadd.f32 %v627, %v639
    %v641 = vpop.f32.mrf.mxu0
    %642 = vdwg.mxu0
    %643 = vmatpush.bf16.msra.mxu0 %v497
    %644 = vmatpush.bf16.msra.mxu0 %v496
    %645 = vmatpush.bf16.msra.mxu0 %v495
    %646 = vmatpush.bf16.msra.mxu0 %v494
    %647 = vmatpush.bf16.msra.mxu0 %v493
    %648 = vmatpush.bf16.msra.mxu0 %v492
    %649 = vmatpush.bf16.msra.mxu0 %v491
    %650 = vmatpush.bf16.msra.mxu0 %v490
    %651 = vmatmul.bf16.gmra.mxu0 %v59
    %v652 = vpop.f32.mrf.mxu0
    %v653 = vadd.f32 %v640, %v652
    %v654 = vpop.f32.mrf.mxu0
    %655 = vdwg.mxu0
    %656 = vmatpush.bf16.msra.mxu0 %v505
    %657 = vmatpush.bf16.msra.mxu0 %v504
    %658 = vmatpush.bf16.msra.mxu0 %v503
    %659 = vmatpush.bf16.msra.mxu0 %v502
    %660 = vmatpush.bf16.msra.mxu0 %v501
    %661 = vmatpush.bf16.msra.mxu0 %v500
    %662 = vmatpush.bf16.msra.mxu0 %v499
    %663 = vmatpush.bf16.msra.mxu0 %v498
    %664 = vmatmul.bf16.gmra.mxu0 %v60
    %v665 = vpop.f32.mrf.mxu0
    %v666 = vadd.f32 %v653, %v665
    %v667 = vpop.f32.mrf.mxu0
    %668 = vdwg.mxu0
    %669 = vmatpush.bf16.msra.mxu0 %v513
    %670 = vmatpush.bf16.msra.mxu0 %v512
    %671 = vmatpush.bf16.msra.mxu0 %v511
    %672 = vmatpush.bf16.msra.mxu0 %v510
    %673 = vmatpush.bf16.msra.mxu0 %v509
    %674 = vmatpush.bf16.msra.mxu0 %v508
    %675 = vmatpush.bf16.msra.mxu0 %v507
    %676 = vmatpush.bf16.msra.mxu0 %v506
    %677 = vmatmul.bf16.gmra.mxu0 %v61
    %v678 = vpop.f32.mrf.mxu0
    %v679 = vadd.f32 %v666, %v678
    %v680 = vpop.f32.mrf.mxu0
    %681 = vdwg.mxu0
    %vm682 = vcmask 1041408
    %v683 = vsel %vm682, %v679, -inf
    %684 = vmax.xlane.f32.xlu0 %v683
    %v685 = vpop.xlane.xlu0 %684
    %v686 = vsub.f32 %v679, %v685
    %v687 = vmul.f32 %v686, 1.442695
    %v688 = vpow.pop %v687
    %v689 = vsel %vm682, %v688, 0.0
    %690 = vadd.xlane.f32.xlu0 %v689
    %v691 = vpop.xlane.xlu0 %690
    %v692 = vrcp.pop %v691
    %v693 = vmul.f32 %v691, %v692
    %v694 = vsub.f32 1.0, %v693
    %v695 = vmul.f32 %v692, %v694
    %v696 = vadd.f32 %v692, %v695
    %vm697 = vweird.f32 %v691
    %vm698 = vweird.f32 %v692
    %vm699 = vmor %vm697, %vm698
    %v700 = vsel %vm699, %v692, %v696
    %v701 = vand.u32 2147483647, %v691
    %vm702 = vcmp.eq.f32.partialorder %v701, 8.507059e+37
    %v703 = vand.u32 %v691, 2147483648
    %v704 = vor.u32 1.1754944e-38, %v703
    %v705 = vsel %vm702, %v704, %v700
    %v706 = vmul.f32 %v688, %v705
    %707 = vst [vmem:[#allocation5] sm:$0x3] %v706
    // Predicated region
    $region18: #{fc_softmax.1} parent=1 // pred_check
      _
    $region19: #{fc_softmax.1} parent=1 // pred_check_branch
      %709 = sbr.rel (0) target = $region21
    $region20: #{fc_softmax.1} parent=1 // pred_region
      %711 = vsyncadd [#allocation4], 0
      %s713 = sshll.u32 [#allocation5], 4
      %s714 = int_to_ptr.vmem [resolvable:$true] %s713
      %s715 = sshll.u32 %s3, 4
      %s716 = int_to_ptr.hbm [resolvable:$true] %s715
      %718 = dma.vmem_to_hbm [thread:$0]  %s714, 32, %s716, [#allocation4]
    $region21: #{fc_softmax.1} parent=1 // pred_fallthru
      _
    // Predicated region
    $region22: #{fc_softmax.1} parent=1 // pred_check
      _
    $region23: #{fc_softmax.1} parent=1 // pred_check_branch
      %720 = sbr.rel (0) target = $region25
    $region24: #{fc_softmax.1} parent=1 // pred_region
      %722 = dma.done [#allocation4], 32
    $region25: #{fc_softmax.1} parent=1 // pred_fallthru
      _
    %723 = vsyncpa [#allocation3], 1
    %724 = vsyncpa [#allocation4], 1

</llo_original>
